<compile_context>
chip_gen: v7x
topology: tpu7x:2x2x1
jax: 0.10.0
libtpu: 0.0.40
codegen_flags: <defaults>
</compile_context>

<pallas_src>
import functools

import jax
import jax.numpy as jnp
from jax.experimental import pallas as pl
from jax.experimental.pallas import tpu as pltpu

_MAX_INFLIGHT_DMAS = 8  # ring depth of concurrent row-gather DMAs per grid step


def _gather_kernel(ids_ref, w_hbm, out_ref, sem):
    """Gather rows of the HBM embedding table into the current output tile.

    ids_ref: SMEM (n_pad,) int32   -- all token ids (scalar-prefetched)
    w_hbm:   ANY  (V, D_pad)       -- embedding table, left in HBM
    out_ref: VMEM (row_block, D_pad) -- output tile for this grid step
    sem:     DMA semaphore ring of size min(_MAX_INFLIGHT_DMAS, row_block)
    """
    rows = out_ref.shape[0]
    inflight = min(_MAX_INFLIGHT_DMAS, rows)
    base = pl.program_id(0) * rows

    def row_start(r):
        idx = ids_ref[base + r]
        pltpu.make_async_copy(
            w_hbm.at[pl.ds(idx, 1)],        # (1, D) row in HBM
            out_ref.at[pl.ds(r, 1)],        # (1, D) row of the output tile
            sem.at[r % inflight],
        ).start()

    def row_wait(r):
        # Wait descriptor only needs matching shapes + the semaphore slot.
        pltpu.make_async_copy(
            w_hbm.at[pl.ds(0, 1)],
            out_ref.at[pl.ds(r, 1)],
            sem.at[r % inflight],
        ).wait()

    # Prime the ring with the first `inflight` row copies.
    @pl.loop(0, inflight)
    def _prime(r):
        row_start(r)

    # Drain: wait row r, immediately refill its semaphore slot with row r+K.
    @pl.loop(0, rows)
    def _drain(r):
        row_wait(r)

        @pl.when(r + inflight < rows)
        def _():
            row_start(r + inflight)


@functools.partial(jax.jit, static_argnames=("row_block",))
def glove_embedding_forward(x, weights, *, row_block=256):
    """x: [B, S] integer ids, weights: [V, D] float32 -> [B, S, D] float32."""
    b, s = x.shape
    v, d = weights.shape
    n = b * s

    # Clamp ids so an out-of-range id can never drive an out-of-bounds HBM DMA.
    # TODO(synk): torch.nn.Embedding raises on OOB ids; here we clamp instead.
    ids = jnp.clip(x.reshape(n).astype(jnp.int32), 0, v - 1)

    # Rows per grid step: large enough to amortize per-step overhead (~0.35us),
    # capped by the problem size, rounded to a sublane (8) multiple.
    rows = min(row_block, n)
    rows = ((rows + 7) // 8) * 8
    n_pad = ((n + rows - 1) // rows) * rows
    if n_pad != n:
        ids = jnp.pad(ids, (0, n_pad - n))  # pad with id 0 (a valid row)

    # Lane-dense output: pad the embedding dim to a multiple of 128 if needed
    # (no-op for D=128; relevant for real GloVe D=300 -> 384).
    d_pad = ((d + 127) // 128) * 128
    w = weights if d_pad == d else jnp.pad(weights, ((0, 0), (0, d_pad - d)))

    inflight = min(_MAX_INFLIGHT_DMAS, rows)

    out_flat = pl.pallas_call(
        _gather_kernel,
        out_shape=jax.ShapeDtypeStruct((n_pad, d_pad), weights.dtype),
        grid_spec=pltpu.PrefetchScalarGridSpec(
            num_scalar_prefetch=1,                        # ids -> SMEM
            grid=(n_pad // rows,),
            in_specs=[pl.BlockSpec(memory_space=pl.ANY)],  # table stays in HBM
            out_specs=pl.BlockSpec((rows, d_pad), lambda i, ids: (i, 0)),
            scratch_shapes=[pltpu.SemaphoreType.DMA((inflight,))],
        ),
        compiler_params=pltpu.CompilerParams(
            dimension_semantics=("parallel",),            # split rows across TCs
        ),
    )(ids, w)

    return out_flat[:n, :d].reshape(b, s, d)


def make_glove_weights(key, vocab_size, dim, padding_idx=None):
    """Deterministic stand-in for GloveEmbedding._get_weights():
    uniform(-0.25, 0.25) rows (as for OOV words), zeros at padding_idx."""
    w = jax.random.uniform(
        key, (vocab_size, dim), dtype=jnp.float32, minval=-0.25, maxval=0.25
    )
    if padding_idx is not None:
        w = w.at[padding_idx].set(0.0)
    return w


if __name__ == "__main__":
    # Small shapes consistent with the module's forward: x is [batch, seq] ids.
    B, S = 2, 8          # 16 tokens total
    VOCAB, DIM = 64, 128
    PADDING_IDX = 0

    key = jax.random.PRNGKey(0)
    k_w, k_x = jax.random.split(key)

    weights = make_glove_weights(k_w, VOCAB, DIM, padding_idx=PADDING_IDX)
    x = jax.random.randint(k_x, (B, S), minval=0, maxval=VOCAB, dtype=jnp.int32)

    out = glove_embedding_forward(x, weights)
    out = jax.block_until_ready(out)

    # Reference check: plain gather.
    ref = weights[x]
    assert out.shape == (B, S, DIM)
    assert jnp.allclose(out, ref, atol=1e-6), "mismatch vs reference gather"

    print("KERNEL_OK")
</pallas_src>

<mosaic_0001>
module attributes {stable_mosaic.version = 11 : i64} {
  func.func @_gather_kernel(%arg0: i32, %arg1: memref<16xi32, #tpu.memory_space<smem>>, %arg2: memref<64x128xf32, #tpu.memory_space<any>>, %arg3: memref<16x128xf32, #tpu.memory_space<vmem>>, %arg4: memref<8x!tpu.dma_semaphore, #tpu.memory_space<semaphore_mem>>) attributes {dimension_semantics = [#tpu.dimension_semantics<parallel>], iteration_bounds = array<i64: 1>, scalar_prefetch = 1 : i64, scratch_operands = 1 : i64, tpu.core_type = #tpu.core_type<tc>, window_params = [{}, {transform_indices = @transform_1, window_bounds = array<i64: 16, 128>}]} {
    %c16_i32 = arith.constant 16 : i32
    %0 = arith.muli %arg0, %c16_i32 : i32
    %c0_i32 = arith.constant 0 : i32
    %c8_i32 = arith.constant 8 : i32
    %1 = arith.addi %c0_i32, %c8_i32 : i32
    %c1_i32 = arith.constant 1 : i32
    scf.for %arg5 = %c0_i32 to %1 step %c1_i32  : i32 {
      %c1_i32_5 = arith.constant 1 : i32
      %3 = arith.muli %arg5, %c1_i32_5 : i32
      %c0_i32_6 = arith.constant 0 : i32
      %4 = arith.addi %c0_i32_6, %3 : i32
      %5 = arith.addi %0, %4 : i32
      %6 = arith.index_cast %5 : i32 to index
      %7 = memref.load %arg1[%6] : memref<16xi32, #tpu.memory_space<smem>>
      %c8_i32_7 = arith.constant 8 : i32
      %c0_i32_8 = arith.constant 0 : i32
      %8 = arith.cmpi eq, %c8_i32_7, %c0_i32_8 : i32
      %c1_i32_9 = arith.constant 1 : i32
      %9 = arith.select %8, %c1_i32_9, %c8_i32_7 : i32
      %10 = arith.remsi %4, %9 : i32
      %c0_i32_10 = arith.constant 0 : i32
      %11 = arith.cmpi ne, %10, %c0_i32_10 : i32
      %c0_i32_11 = arith.constant 0 : i32
      %12 = arith.cmpi slt, %10, %c0_i32_11 : i32
      %c0_i32_12 = arith.constant 0 : i32
      %13 = arith.cmpi slt, %9, %c0_i32_12 : i32
      %14 = arith.xori %12, %13 : i1
      %15 = arith.andi %14, %11 : i1
      %16 = arith.addi %10, %9 : i32
      %17 = arith.select %15, %16, %10 : i32
      %c0_i32_13 = arith.constant 0 : i32
      %18 = tpu.memref_slice %arg2[%7, %c0_i32_13] : memref<64x128xf32, #tpu.memory_space<any>> -> memref<1x128xf32, #tpu.memory_space<any>>
      %c0_i32_14 = arith.constant 0 : i32
      %19 = tpu.memref_slice %arg3[%4, %c0_i32_14] : memref<16x128xf32, #tpu.memory_space<vmem>> -> memref<1x128xf32, #tpu.memory_space<vmem>>
      %20 = tpu.memref_slice %arg4[%17] : memref<8x!tpu.dma_semaphore, #tpu.memory_space<semaphore_mem>> -> memref<1x!tpu.dma_semaphore, #tpu.memory_space<semaphore_mem>>
      %21 = tpu.memref_squeeze %20 : memref<1x!tpu.dma_semaphore, #tpu.memory_space<semaphore_mem>> -> memref<!tpu.dma_semaphore, #tpu.memory_space<semaphore_mem>>
      tpu.enqueue_dma source(%18 : memref<1x128xf32, #tpu.memory_space<any>>) target(%19 : memref<1x128xf32, #tpu.memory_space<vmem>>) target_semaphore(%21 : memref<!tpu.dma_semaphore, #tpu.memory_space<semaphore_mem>>)
    }
    %c8_i32_0 = arith.constant 8 : i32
    %c0_i32_1 = arith.constant 0 : i32
    %c16_i32_2 = arith.constant 16 : i32
    %2 = arith.addi %c0_i32_1, %c16_i32_2 : i32
    %c1_i32_3 = arith.constant 1 : i32
    scf.for %arg5 = %c0_i32_1 to %2 step %c1_i32_3  : i32 {
      %c1_i32_5 = arith.constant 1 : i32
      %3 = arith.muli %arg5, %c1_i32_5 : i32
      %c0_i32_6 = arith.constant 0 : i32
      %4 = arith.addi %c0_i32_6, %3 : i32
      %c8_i32_7 = arith.constant 8 : i32
      %c0_i32_8 = arith.constant 0 : i32
      %5 = arith.cmpi eq, %c8_i32_7, %c0_i32_8 : i32
      %c1_i32_9 = arith.constant 1 : i32
      %6 = arith.select %5, %c1_i32_9, %c8_i32_7 : i32
      %7 = arith.remsi %4, %6 : i32
      %c0_i32_10 = arith.constant 0 : i32
      %8 = arith.cmpi ne, %7, %c0_i32_10 : i32
      %c0_i32_11 = arith.constant 0 : i32
      %9 = arith.cmpi slt, %7, %c0_i32_11 : i32
      %c0_i32_12 = arith.constant 0 : i32
      %10 = arith.cmpi slt, %6, %c0_i32_12 : i32
      %11 = arith.xori %9, %10 : i1
      %12 = arith.andi %11, %8 : i1
      %13 = arith.addi %7, %6 : i32
      %14 = arith.select %12, %13, %7 : i32
      %c0_i32_13 = arith.constant 0 : i32
      %c0_i32_14 = arith.constant 0 : i32
      %15 = tpu.memref_slice %arg2[%c0_i32_13, %c0_i32_14] : memref<64x128xf32, #tpu.memory_space<any>> -> memref<1x128xf32, #tpu.memory_space<any>>
      %c0_i32_15 = arith.constant 0 : i32
      %16 = tpu.memref_slice %arg3[%4, %c0_i32_15] : memref<16x128xf32, #tpu.memory_space<vmem>> -> memref<1x128xf32, #tpu.memory_space<vmem>>
      %17 = tpu.memref_slice %arg4[%14] : memref<8x!tpu.dma_semaphore, #tpu.memory_space<semaphore_mem>> -> memref<1x!tpu.dma_semaphore, #tpu.memory_space<semaphore_mem>>
      %18 = tpu.memref_squeeze %17 : memref<1x!tpu.dma_semaphore, #tpu.memory_space<semaphore_mem>> -> memref<!tpu.dma_semaphore, #tpu.memory_space<semaphore_mem>>
      tpu.wait_dma2 semaphore(%18 : memref<!tpu.dma_semaphore, #tpu.memory_space<semaphore_mem>>) src(%15 : memref<1x128xf32, #tpu.memory_space<any>>) dst(%16 : memref<1x128xf32, #tpu.memory_space<vmem>>)
      %c8_i32_16 = arith.constant 8 : i32
      %19 = arith.addi %4, %c8_i32_16 : i32
      %c16_i32_17 = arith.constant 16 : i32
      %20 = arith.cmpi slt, %19, %c16_i32_17 : i32
      %21 = arith.extui %20 : i1 to i32
      %c0_i32_18 = arith.constant 0 : i32
      %22 = arith.cmpi ne, %21, %c0_i32_18 : i32
      scf.if %22 {
        %c8_i32_19 = arith.constant 8 : i32
        %23 = arith.addi %4, %c8_i32_19 : i32
        %24 = arith.addi %0, %23 : i32
        %25 = arith.index_cast %24 : i32 to index
        %26 = memref.load %arg1[%25] : memref<16xi32, #tpu.memory_space<smem>>
        %c8_i32_20 = arith.constant 8 : i32
        %c0_i32_21 = arith.constant 0 : i32
        %27 = arith.cmpi eq, %c8_i32_20, %c0_i32_21 : i32
        %c1_i32_22 = arith.constant 1 : i32
        %28 = arith.select %27, %c1_i32_22, %c8_i32_20 : i32
        %29 = arith.remsi %23, %28 : i32
        %c0_i32_23 = arith.constant 0 : i32
        %30 = arith.cmpi ne, %29, %c0_i32_23 : i32
        %c0_i32_24 = arith.constant 0 : i32
        %31 = arith.cmpi slt, %29, %c0_i32_24 : i32
        %c0_i32_25 = arith.constant 0 : i32
        %32 = arith.cmpi slt, %28, %c0_i32_25 : i32
        %33 = arith.xori %31, %32 : i1
        %34 = arith.andi %33, %30 : i1
        %35 = arith.addi %29, %28 : i32
        %36 = arith.select %34, %35, %29 : i32
        %c0_i32_26 = arith.constant 0 : i32
        %37 = tpu.memref_slice %arg2[%26, %c0_i32_26] : memref<64x128xf32, #tpu.memory_space<any>> -> memref<1x128xf32, #tpu.memory_space<any>>
        %c0_i32_27 = arith.constant 0 : i32
        %38 = tpu.memref_slice %arg3[%23, %c0_i32_27] : memref<16x128xf32, #tpu.memory_space<vmem>> -> memref<1x128xf32, #tpu.memory_space<vmem>>
        %39 = tpu.memref_slice %arg4[%36] : memref<8x!tpu.dma_semaphore, #tpu.memory_space<semaphore_mem>> -> memref<1x!tpu.dma_semaphore, #tpu.memory_space<semaphore_mem>>
        %40 = tpu.memref_squeeze %39 : memref<1x!tpu.dma_semaphore, #tpu.memory_space<semaphore_mem>> -> memref<!tpu.dma_semaphore, #tpu.memory_space<semaphore_mem>>
        tpu.enqueue_dma source(%37 : memref<1x128xf32, #tpu.memory_space<any>>) target(%38 : memref<1x128xf32, #tpu.memory_space<vmem>>) target_semaphore(%40 : memref<!tpu.dma_semaphore, #tpu.memory_space<semaphore_mem>>)
      } else {
      }
    }
    %c16_i32_4 = arith.constant 16 : i32
    return
  }
  func.func @transform_1(%arg0: i32, %arg1: memref<16xi32, #tpu.memory_space<smem>>) -> (i32, i32) {
    %c0_i32 = arith.constant 0 : i32
    %c0_i32_0 = arith.constant 0 : i32
    return %arg0, %c0_i32 : i32, i32
  }
}

</mosaic_0001>

<llo_original>
// kernel: glove_embedding_forward.1
$region0: #{glove_embedding_forward.1}
  #allocation0 [shape = 'u32[]', space=smem, size = 0x4, offset = 0x4, fixed_abs, tag = 'smem constant byte address 0x4 - core index']
  #allocation1 [shape = 'u32[144,128]{1,0:T(1,128)}', space=vmem, size = 0x12000, scoped, tag = 'internal scratch']
  #allocation2 [shape = 's32[8]{0}', space=sflag, size = 0x20, scoped, tag = 'scratch operand']
  #allocation3 [shape = 's32[1]{0}', space=sflag, size = 0x4, scoped, tag = 'scoped memory for glove_embedding_forward.1']
  #allocation4 [shape = 'u8[512]{0}', space=smem, size = 0x200, scoped, tag = 'prefetched SMEM operand 0']
  #allocation7 [shape = 's32[]', space=sflag, size = 0x4, offset = 0, fixed_abs, tag = 'sflag constant byte address 0x0 - dummy sync flag']
  #allocation8 [shape = 's32[]', space=sflag, size = 0x4, offset = 0, fixed_abs, tag = 'sflag constant byte address 0x0 - dummy sync flag']
  #allocation9 [shape = 'u32[]', space=smem, size = 0x4, offset = 0x44, fixed_abs, tag = 'smem constant byte address 0x44 - assertion arg 0']
  #allocation10 [shape = 'u32[]', space=smem, size = 0x4, offset = 0x48, fixed_abs, tag = 'smem constant byte address 0x48 - assertion arg 1']
  #allocation11 [shape = 's32[]', space=sflag, size = 0x4, offset = 0, fixed_abs, tag = 'sflag constant byte address 0x0 - dummy sync flag']
  #allocation12 [shape = 's32[]', space=sflag, size = 0x4, offset = 0, fixed_abs, tag = 'sflag constant byte address 0x0 - dummy sync flag']
  %s0 = inlined_call_operand.vmem [shape: s32[16], index: 0, kind: input, shape index: {}]
  %s1 = inlined_call_operand.hbm [shape: f32[64,128], index: 1, kind: input, shape index: {}]
  %s2 = inlined_call_operand.hbm [shape: f32[16,128], index: 2, kind: output, shape index: {}]
  %s3 = sld [smem:[#allocation0]]
  $region36: #{glove_embedding_forward.1} parent=0
    _
  %s5 = ssub.s32 1, %s3
  %s6 = scalar_select 0, %s5, %s3
  %s7 = sshll.u32 %s0, 4
  %s8 = int_to_ptr.vmem [resolvable:$true] %s7
  %10 = dma.vmem_to_smem %s8, 16, [#allocation4], [#allocation3]
  %11 = dma.done [#allocation3], 16
  %12 = sfence
  $region1: #{glove_embedding_forward.1} parent=0
    #allocation5 [shape = 'u8[8192]{0}', space=vmem, size = 0x2000, scoped, tag = 'output window, operand 0, single buffered']
    #allocation6 [shape = 's32[1]{0}', space=sflag, size = 0x4, scoped, tag = 'scoped memory for glove_embedding_forward.1']
    %13 = vsyncpa [#allocation6], 0
    %s14 = smul.u32 0, 16
    loop: start=0, step=1, limit=8
    $region2: #{glove_embedding_forward.1} parent=1 // loop_pre_header
      _
    $region3: #{glove_embedding_forward.1} parent=1 // loop_header
      %s16 = sphi 0, %s20
      %p17 = scmp.ge.s32.totalorder %s16, 8
    $region4: #{glove_embedding_forward.1} parent=1 // loop_header_branch
      %19 = sbr.rel (%p17) target = $region8
    $region5: #{glove_embedding_forward.1} parent=1 // loop_body
      %s21 = sadd.s32 %s14, %s16
      %s22 = sld [smem:[#allocation4 + %s21]]
      %p23 = scmp.lt.s32.totalorder %s16, 0
      %s24 = ssub.s32 0, %s16
      %s25 = scalar_select %p23, %s24, %s16
      %s26 = sand.u32 %s25, 7
      %s27 = ssub.s32 0, %s26
      %s28 = scalar_select %p23, %s27, %s26
      %p29 = scmp.ne.s32.totalorder %s28, 0
      %p30 = scmp.lt.s32.totalorder %s28, 0
      %p31 = pnand %p30, %p29
      %p32 = pneg %p31
      %s33 = sadd.s32 %s28, 8
      %s34 = scalar_select %p32, %s33, %s28
      %s35 = smul.addr %s22, 16
      %s36 = scalar_lea.hbm %s1, %s35
      %s37 = scalar_lea.vmem [#allocation5], %s16
      %s38 = scalar_lea.sflag [#allocation2], %s34
      // Predicated region
      $region9: #{glove_embedding_forward.1} parent=5 // pred_check
        _
      $region10: #{glove_embedding_forward.1} parent=5 // pred_check_branch
        %40 = sbr.rel target = $region12
      $region11: #{glove_embedding_forward.1} parent=5 // pred_region
        %41 = sst [smem:[#allocation9]] [#allocation8]
        %42 = sst [smem:[#allocation10]] [#allocation7]
      $region12: #{glove_embedding_forward.1} parent=5 // pred_fallthru
        _
      %44 = shalt.err (0)
      %s46 = sshll.u32 %s37, 4
      %s47 = int_to_ptr.vmem [resolvable:$true] %s46
      %49 = dma.hbm_to_vmem [thread:$0]  %s36, 16, %s47, %s38
    $region6: #{glove_embedding_forward.1} parent=1 // loop_footer
      %s20 = sadd.s32 1, %s16
    $region7: #{glove_embedding_forward.1} parent=1 // loop_footer_branch
      %15 = sbr.rel target = $region3
    $region8: #{glove_embedding_forward.1} parent=1 // loop_exit
      _
    loop: start=0, step=1, limit=16
    $region13: #{glove_embedding_forward.1} parent=1 // loop_pre_header
      _
    $region14: #{glove_embedding_forward.1} parent=1 // loop_header
      %s51 = sphi 0, %s55
      %p52 = scmp.ge.s32.totalorder %s51, 16
    $region15: #{glove_embedding_forward.1} parent=1 // loop_header_branch
      %54 = sbr.rel (%p52) target = $region19
    $region16: #{glove_embedding_forward.1} parent=1 // loop_body
      %p56 = scmp.lt.s32.totalorder %s51, 0
      %s57 = ssub.s32 0, %s51
      %s58 = scalar_select %p56, %s57, %s51
      %s59 = sand.u32 %s58, 7
      %s60 = ssub.s32 0, %s59
      %s61 = scalar_select %p56, %s60, %s59
      %p62 = scmp.ne.s32.totalorder %s61, 0
      %p63 = scmp.lt.s32.totalorder %s61, 0
      %p64 = pnand %p63, %p62
      %p65 = pneg %p64
      %s66 = sadd.s32 %s61, 8
      %s67 = scalar_select %p65, %s66, %s61
      %s68 = scalar_lea.sflag [#allocation2], %s67
      %s69 = smul.u32 1, 1
      %s70 = sshll.u32 %s69, 4
      %71 = dma.done %s68, %s70
      %s72 = sadd.s32 %s51, 8
      %p73 = scmp.lt.s32.totalorder %s72, 16
      // Predicated region
      $region20: #{glove_embedding_forward.1} parent=16 // pred_check
        %p74 = pneg %p73
      $region21: #{glove_embedding_forward.1} parent=16 // pred_check_branch
        %76 = sbr.rel (%p74) target = $region23
      $region22: #{glove_embedding_forward.1} parent=16 // pred_region
        %s77 = sadd.s32 %s14, %s72
        %s78 = sld [smem:[#allocation4 + %s77]]
        %p79 = scmp.lt.s32.totalorder %s72, 0
        %s80 = ssub.s32 0, %s72
        %s81 = scalar_select %p79, %s80, %s72
        %s82 = sand.u32 %s81, 7
        %s83 = ssub.s32 0, %s82
        %s84 = scalar_select %p79, %s83, %s82
        %p85 = scmp.ne.s32.totalorder %s84, 0
        %p86 = scmp.lt.s32.totalorder %s84, 0
        %p87 = pnand %p86, %p85
        %p88 = pneg %p87
        %s89 = sadd.s32 %s84, 8
        %s90 = scalar_select %p88, %s89, %s84
        %s91 = smul.addr %s78, 16
        %s92 = scalar_lea.hbm %s1, %s91
        %s93 = scalar_lea.vmem [#allocation5], %s72
        %s94 = scalar_lea.sflag [#allocation2], %s90
        // Predicated region
        $region24: #{glove_embedding_forward.1} parent=22 // pred_check
          _
        $region25: #{glove_embedding_forward.1} parent=22 // pred_check_branch
          %96 = sbr.rel target = $region27
        $region26: #{glove_embedding_forward.1} parent=22 // pred_region
          %97 = sst [smem:[#allocation9]] [#allocation12]
          %98 = sst [smem:[#allocation10]] [#allocation11]
        $region27: #{glove_embedding_forward.1} parent=22 // pred_fallthru
          _
        %100 = shalt.err (0)
        %s102 = sshll.u32 %s93, 4
        %s103 = int_to_ptr.vmem [resolvable:$true] %s102
        %105 = dma.hbm_to_vmem [thread:$0]  %s92, 16, %s103, %s94
      $region23: #{glove_embedding_forward.1} parent=16 // pred_fallthru
        _
    $region17: #{glove_embedding_forward.1} parent=1 // loop_footer
      %s55 = sadd.s32 1, %s51
    $region18: #{glove_embedding_forward.1} parent=1 // loop_footer_branch
      %50 = sbr.rel target = $region14
    $region19: #{glove_embedding_forward.1} parent=1 // loop_exit
      _
    // Predicated region
    $region28: #{glove_embedding_forward.1} parent=1 // pred_check
      _
    $region29: #{glove_embedding_forward.1} parent=1 // pred_check_branch
      %107 = sbr.rel (0) target = $region31
    $region30: #{glove_embedding_forward.1} parent=1 // pred_region
      %s109 = ssub.s32 256, 256
      %110 = vsyncadd [#allocation6], %s109
      %s111 = sshll.u32 [#allocation5], 4
      %s112 = int_to_ptr.vmem [resolvable:$true] %s111
      %117 = dma.vmem_to_hbm [thread:$0]  %s112, 256, %s2, [#allocation6], 128, 128, 8
    $region31: #{glove_embedding_forward.1} parent=1 // pred_fallthru
      _
    // Predicated region
    $region32: #{glove_embedding_forward.1} parent=1 // pred_check
      _
    $region33: #{glove_embedding_forward.1} parent=1 // pred_check_branch
      %119 = sbr.rel (0) target = $region35
    $region34: #{glove_embedding_forward.1} parent=1 // pred_region
      %120 = dma.done [#allocation6], 256
    $region35: #{glove_embedding_forward.1} parent=1 // pred_fallthru
      _
    %121 = vsyncpa [#allocation6], 1
  %122 = vsyncmov [#allocation2]
  %s123 = vpop.sfrf %122
  %p124 = scmp.eq.s32.totalorder %s123, 0
  %p125 = pneg %p124
  %127 = shalt.err (%p125)
  %s128 = scalar_lea.sflag [#allocation2], 1
  %129 = vsyncmov %s128
  %s130 = vpop.sfrf %129
  %p131 = scmp.eq.s32.totalorder %s130, 0
  %p132 = pneg %p131
  %134 = shalt.err (%p132)
  %s135 = scalar_lea.sflag [#allocation2], 2
  %136 = vsyncmov %s135
  %s137 = vpop.sfrf %136
  %p138 = scmp.eq.s32.totalorder %s137, 0
  %p139 = pneg %p138
  %141 = shalt.err (%p139)
  %s142 = scalar_lea.sflag [#allocation2], 3
  %143 = vsyncmov %s142
  %s144 = vpop.sfrf %143
  %p145 = scmp.eq.s32.totalorder %s144, 0
  %p146 = pneg %p145
  %148 = shalt.err (%p146)
  %s149 = scalar_lea.sflag [#allocation2], 4
  %150 = vsyncmov %s149
  %s151 = vpop.sfrf %150
  %p152 = scmp.eq.s32.totalorder %s151, 0
  %p153 = pneg %p152
  %155 = shalt.err (%p153)
  %s156 = scalar_lea.sflag [#allocation2], 5
  %157 = vsyncmov %s156
  %s158 = vpop.sfrf %157
  %p159 = scmp.eq.s32.totalorder %s158, 0
  %p160 = pneg %p159
  %162 = shalt.err (%p160)
  %s163 = scalar_lea.sflag [#allocation2], 6
  %164 = vsyncmov %s163
  %s165 = vpop.sfrf %164
  %p166 = scmp.eq.s32.totalorder %s165, 0
  %p167 = pneg %p166
  %169 = shalt.err (%p167)
  %s170 = scalar_lea.sflag [#allocation2], 7
  %171 = vsyncmov %s170
  %s172 = vpop.sfrf %171
  %p173 = scmp.eq.s32.totalorder %s172, 0
  %p174 = pneg %p173
  %176 = shalt.err (%p174)

</llo_original>
